<compile_context>
chip_gen: v6e
topology: v6e:2x2x1
jax: 0.10.0
libtpu: 0.0.40
codegen_flags: <defaults>
</compile_context>

<pallas_src>
from functools import partial

import jax
import jax.numpy as jnp
from jax.experimental import pallas as pl
from jax.experimental.pallas import tpu as pltpu


def critic_kernel(x_ref, w1_ref, b1_ref, w2_ref, b2_ref, w3_ref, b3_ref,
                  w4_ref, b4_ref, o_ref):
    # fc1 (fused concat already done in the wrapper): x (TB, 12) bf16.
    h = jnp.dot(x_ref[...], w1_ref[...],
                preferred_element_type=jnp.float32) + b1_ref[...]
    h = jnp.maximum(h, 0.0).astype(jnp.bfloat16)

    # fc2 + ReLU
    h = jnp.dot(h, w2_ref[...],
                preferred_element_type=jnp.float32) + b2_ref[...]
    h = jnp.maximum(h, 0.0).astype(jnp.bfloat16)

    # fc3 + ReLU
    h = jnp.dot(h, w3_ref[...],
                preferred_element_type=jnp.float32) + b3_ref[...]
    h = jnp.maximum(h, 0.0).astype(jnp.bfloat16)

    # fc4: contract the 32-feature axis of (1,32) x (TB,32) -> (1, TB).
    # Same contraction pattern as q @ k.T; produces a lane-dense output row.
    q = jax.lax.dot_general(w4_ref[...], h, (((1,), (1,)), ((), ())),
                            preferred_element_type=jnp.float32)
    o_ref[...] = (q + b4_ref[...]).astype(o_ref.dtype)


def _cdiv(a, b):
    return -(-a // b)


def _round_up(x, m):
    return _cdiv(x, m) * m


def _default_min_grid_steps():
    # v7x has 2 TensorCores/chip: keep >=2 "parallel" grid steps so both are
    # used.  v5e/v6e have a single TC and prefer the single biggest tile.
    try:
        kind = jax.devices()[0].device_kind.lower()
    except Exception:
        return 1
    return 2 if "7" in kind else 1


def _select_tb(B, tb, min_grid_steps):
    steps = max(min_grid_steps, _cdiv(B, tb))
    TB = _round_up(_cdiv(B, steps), 8)
    if _cdiv(B, TB) > 1:
        # Multi-step grid: tile dims must be (8,128)-aligned (output row blocks
        # are (1, TB), so TB must be a multiple of 128).
        TB = _round_up(TB, 128)
    return max(TB, 8)


@partial(jax.jit, static_argnames=("tb", "min_grid_steps"))
def critic_forward(state, action, kernel_params, *, tb=2048, min_grid_steps=None):
    """Forward pass. `kernel_params` is the output of prepare_params()."""
    w1, b1, w2, b2, w3, b3, w4r, b4 = kernel_params
    B = state.shape[0]
    in_dim = w1.shape[0]

    if min_grid_steps is None:
        min_grid_steps = _default_min_grid_steps()
    TB = _select_tb(B, tb, max(1, min_grid_steps))
    grid_n = _cdiv(B, TB)
    B_pad = grid_n * TB

    # Single concatenated bf16 activation feed (fc1 fusion).  Padding of the
    # ragged tail fuses into the same materialization under jit.
    x = jnp.concatenate([state.astype(jnp.bfloat16),
                         action.astype(jnp.bfloat16)], axis=1)
    if B_pad != B:
        x = jnp.pad(x, ((0, B_pad - B), (0, 0)))

    def resident(arr):
        # Same block index every grid step -> stays resident in VMEM.
        return pl.BlockSpec(arr.shape, lambda i: (0, 0))

    out = pl.pallas_call(
        critic_kernel,
        out_shape=jax.ShapeDtypeStruct((1, B_pad), jnp.float32),
        grid_spec=pltpu.PrefetchScalarGridSpec(
            num_scalar_prefetch=0,
            grid=(grid_n,),
            in_specs=[
                pl.BlockSpec((TB, in_dim), lambda i: (i, 0)),
                resident(w1), resident(b1),
                resident(w2), resident(b2),
                resident(w3), resident(b3),
                resident(w4r), resident(b4),
            ],
            out_specs=pl.BlockSpec((1, TB), lambda i: (0, i)),
        ),
        compiler_params=pltpu.CompilerParams(
            dimension_semantics=("parallel",)),
    )(x, w1, b1, w2, b2, w3, b3, w4r, b4)

    q = out.reshape(B_pad, 1)
    return q[:B] if B_pad != B else q


def init_params(key, state_size, action_size,
                fc1_units=256, fc2_units=128, fc3_units=32):
    """Deterministic init mimicking nn.Linear default (uniform +/- 1/sqrt(fan_in)).

    Weights stored as (in, out); biases as (1, out).  Kept in f32 (master copy).
    """
    dims = [(state_size + action_size, fc1_units),
            (fc1_units, fc2_units),
            (fc2_units, fc3_units),
            (fc3_units, 1)]
    params = []
    for (fan_in, fan_out) in dims:
        key, kw, kb = jax.random.split(key, 3)
        bound = 1.0 / jnp.sqrt(jnp.float32(fan_in))
        w = jax.random.uniform(kw, (fan_in, fan_out), jnp.float32, -bound, bound)
        b = jax.random.uniform(kb, (1, fan_out), jnp.float32, -bound, bound)
        params += [w, b]
    return tuple(params)


def prepare_params(params):
    """Cast weights to bf16 (MXU operands); biases stay f32 (added to f32 acc).

    W4 is flattened to a (1, fc3_units) row for the final dot_general.
    """
    w1, b1, w2, b2, w3, b3, w4, b4 = params
    bf = jnp.bfloat16
    return (w1.astype(bf), b1,
            w2.astype(bf), b2,
            w3.astype(bf), b3,
            w4.reshape(1, -1).astype(bf), b4)


def _reference(state, action, params):
    x = jnp.concatenate([state.astype(jnp.float32),
                         action.astype(jnp.float32)], axis=1)
    w1, b1, w2, b2, w3, b3, w4, b4 = params
    h = jnp.maximum(x @ w1 + b1, 0.0)
    h = jnp.maximum(h @ w2 + b2, 0.0)
    h = jnp.maximum(h @ w3 + b3, 0.0)
    return h @ w4 + b4


if __name__ == "__main__":
    key = jax.random.PRNGKey(0)
    k_state, k_action, k_params = jax.random.split(key, 3)

    state_size = 8
    action_size = 4
    params = init_params(k_params, state_size, action_size)
    kparams = prepare_params(params)

    # bf16 operands (f32 accumulation) -> relaxed tolerances vs. the f32 reference.
    ATOL = RTOL = 5e-2

    # Case 1: batch already a multiple of 8 (single grid step).
    batch = 8
    state = jax.random.normal(k_state, (batch, state_size), jnp.float32)
    action = jax.random.normal(k_action, (batch, action_size), jnp.float32)
    q = critic_forward(state, action, kparams)
    jax.block_until_ready(q)
    q_ref = _reference(state, action, params)
    assert q.shape == (batch, 1)
    assert jnp.allclose(q, q_ref, atol=ATOL, rtol=RTOL)

    # Case 2: ragged batch (exercises the padding path).
    batch2 = 10
    state2 = jax.random.normal(k_state, (batch2, state_size), jnp.float32)
    action2 = jax.random.normal(k_action, (batch2, action_size), jnp.float32)
    q2 = critic_forward(state2, action2, kparams)
    jax.block_until_ready(q2)
    q2_ref = _reference(state2, action2, params)
    assert q2.shape == (batch2, 1)
    assert jnp.allclose(q2, q2_ref, atol=ATOL, rtol=RTOL)

    # Case 3: multi-step grid with a ragged tail (small tb to force 3 steps).
    batch3 = 260
    state3 = jax.random.normal(k_state, (batch3, state_size), jnp.float32)
    action3 = jax.random.normal(k_action, (batch3, action_size), jnp.float32)
    q3 = critic_forward(state3, action3, kparams, tb=128, min_grid_steps=1)
    jax.block_until_ready(q3)
    q3_ref = _reference(state3, action3, params)
    assert q3.shape == (batch3, 1)
    assert jnp.allclose(q3, q3_ref, atol=ATOL, rtol=RTOL)

    print("KERNEL_OK")
</pallas_src>

<mosaic_0001>
module attributes {stable_mosaic.version = 11 : i64} {
  func.func @critic_kernel(%arg0: i32, %arg1: memref<8x12xbf16, #tpu.memory_space<vmem>>, %arg2: memref<12x256xbf16, #tpu.memory_space<vmem>>, %arg3: memref<1x256xf32, #tpu.memory_space<vmem>>, %arg4: memref<256x128xbf16, #tpu.memory_space<vmem>>, %arg5: memref<1x128xf32, #tpu.memory_space<vmem>>, %arg6: memref<128x32xbf16, #tpu.memory_space<vmem>>, %arg7: memref<1x32xf32, #tpu.memory_space<vmem>>, %arg8: memref<1x32xbf16, #tpu.memory_space<vmem>>, %arg9: memref<1x1xf32, #tpu.memory_space<vmem>>, %arg10: memref<1x8xf32, #tpu.memory_space<vmem>>) attributes {dimension_semantics = [#tpu.dimension_semantics<parallel>], iteration_bounds = array<i64: 1>, scalar_prefetch = 0 : i64, scratch_operands = 0 : i64, tpu.core_type = #tpu.core_type<tc>, window_params = [{transform_indices = @transform_0, window_bounds = array<i64: 8, 12>}, {pipeline_mode = #tpu.pipeline_mode<synchronous>, transform_indices = @transform_1, window_bounds = array<i64: 12, 256>}, {pipeline_mode = #tpu.pipeline_mode<synchronous>, transform_indices = @transform_2, window_bounds = array<i64: 1, 256>}, {pipeline_mode = #tpu.pipeline_mode<synchronous>, transform_indices = @transform_3, window_bounds = array<i64: 256, 128>}, {pipeline_mode = #tpu.pipeline_mode<synchronous>, transform_indices = @transform_4, window_bounds = array<i64: 1, 128>}, {pipeline_mode = #tpu.pipeline_mode<synchronous>, transform_indices = @transform_5, window_bounds = array<i64: 128, 32>}, {pipeline_mode = #tpu.pipeline_mode<synchronous>, transform_indices = @transform_6, window_bounds = array<i64: 1, 32>}, {pipeline_mode = #tpu.pipeline_mode<synchronous>, transform_indices = @transform_7, window_bounds = array<i64: 1, 32>}, {pipeline_mode = #tpu.pipeline_mode<synchronous>, transform_indices = @transform_8, window_bounds = array<i64: 1, 1>}, {transform_indices = @transform_9, window_bounds = array<i64: 1, 8>}]} {
    %c0 = arith.constant 0 : index
    %c0_0 = arith.constant 0 : index
    %0 = vector.load %arg1[%c0, %c0_0] : memref<8x12xbf16, #tpu.memory_space<vmem>>, vector<8x12xbf16>
    %c0_1 = arith.constant 0 : index
    %c0_2 = arith.constant 0 : index
    %1 = vector.load %arg2[%c0_1, %c0_2] : memref<12x256xbf16, #tpu.memory_space<vmem>>, vector<12x256xbf16>
    %cst = arith.constant dense<0.000000e+00> : vector<8x256xf32>
    %2 = tpu.matmul %0, %1, %cst {dimension_numbers = #tpu.dot_dimension_numbers<[1], [0], [0], [1], [0, 0, 1, 1], [], []>} : vector<8x12xbf16>, vector<12x256xbf16>, vector<8x256xf32> -> vector<8x256xf32>
    %c0_3 = arith.constant 0 : index
    %c0_4 = arith.constant 0 : index
    %3 = vector.load %arg3[%c0_3, %c0_4] : memref<1x256xf32, #tpu.memory_space<vmem>>, vector<1x256xf32>
    %4 = vector.broadcast %3 : vector<1x256xf32> to vector<8x256xf32>
    %5 = arith.addf %2, %4 : vector<8x256xf32>
    %cst_5 = arith.constant 0.000000e+00 : f32
    %6 = vector.broadcast %cst_5 : f32 to vector<8x256xf32>
    %7 = arith.maximumf %5, %6 : vector<8x256xf32>
    %8 = arith.truncf %7 : vector<8x256xf32> to vector<8x256xbf16>
    %c0_6 = arith.constant 0 : index
    %c0_7 = arith.constant 0 : index
    %9 = vector.load %arg4[%c0_6, %c0_7] : memref<256x128xbf16, #tpu.memory_space<vmem>>, vector<256x128xbf16>
    %cst_8 = arith.constant dense<0.000000e+00> : vector<8x128xf32>
    %10 = tpu.matmul %8, %9, %cst_8 {dimension_numbers = #tpu.dot_dimension_numbers<[1], [0], [0], [1], [0, 0, 1, 1], [], []>} : vector<8x256xbf16>, vector<256x128xbf16>, vector<8x128xf32> -> vector<8x128xf32>
    %c0_9 = arith.constant 0 : index
    %c0_10 = arith.constant 0 : index
    %11 = vector.load %arg5[%c0_9, %c0_10] : memref<1x128xf32, #tpu.memory_space<vmem>>, vector<1x128xf32>
    %12 = vector.broadcast %11 : vector<1x128xf32> to vector<8x128xf32>
    %13 = arith.addf %10, %12 : vector<8x128xf32>
    %cst_11 = arith.constant 0.000000e+00 : f32
    %14 = vector.broadcast %cst_11 : f32 to vector<8x128xf32>
    %15 = arith.maximumf %13, %14 : vector<8x128xf32>
    %16 = arith.truncf %15 : vector<8x128xf32> to vector<8x128xbf16>
    %c0_12 = arith.constant 0 : index
    %c0_13 = arith.constant 0 : index
    %17 = vector.load %arg6[%c0_12, %c0_13] : memref<128x32xbf16, #tpu.memory_space<vmem>>, vector<128x32xbf16>
    %cst_14 = arith.constant dense<0.000000e+00> : vector<8x32xf32>
    %18 = tpu.matmul %16, %17, %cst_14 {dimension_numbers = #tpu.dot_dimension_numbers<[1], [0], [0], [1], [0, 0, 1, 1], [], []>} : vector<8x128xbf16>, vector<128x32xbf16>, vector<8x32xf32> -> vector<8x32xf32>
    %c0_15 = arith.constant 0 : index
    %c0_16 = arith.constant 0 : index
    %19 = vector.load %arg7[%c0_15, %c0_16] : memref<1x32xf32, #tpu.memory_space<vmem>>, vector<1x32xf32>
    %20 = vector.broadcast %19 : vector<1x32xf32> to vector<8x32xf32>
    %21 = arith.addf %18, %20 : vector<8x32xf32>
    %cst_17 = arith.constant 0.000000e+00 : f32
    %22 = vector.broadcast %cst_17 : f32 to vector<8x32xf32>
    %23 = arith.maximumf %21, %22 : vector<8x32xf32>
    %24 = arith.truncf %23 : vector<8x32xf32> to vector<8x32xbf16>
    %c0_18 = arith.constant 0 : index
    %c0_19 = arith.constant 0 : index
    %25 = vector.load %arg8[%c0_18, %c0_19] : memref<1x32xbf16, #tpu.memory_space<vmem>>, vector<1x32xbf16>
    %cst_20 = arith.constant dense<0.000000e+00> : vector<1x8xf32>
    %26 = tpu.matmul %25, %24, %cst_20 {dimension_numbers = #tpu.dot_dimension_numbers<[1], [1], [0], [0], [0, 0, 1, 0], [], []>} : vector<1x32xbf16>, vector<8x32xbf16>, vector<1x8xf32> -> vector<1x8xf32>
    %c0_21 = arith.constant 0 : index
    %c0_22 = arith.constant 0 : index
    %27 = vector.load %arg9[%c0_21, %c0_22] : memref<1x1xf32, #tpu.memory_space<vmem>>, vector<1x1xf32>
    %28 = vector.broadcast %27 : vector<1x1xf32> to vector<1x8xf32>
    %29 = arith.addf %26, %28 : vector<1x8xf32>
    %c0_23 = arith.constant 0 : index
    %c0_24 = arith.constant 0 : index
    %30 = vector.load %arg10[%c0_23, %c0_24] : memref<1x8xf32, #tpu.memory_space<vmem>>, vector<1x8xf32>
    tpu.vector_store %arg10[%c0_23, %c0_24], %29 {strides = array<i32>} : memref<1x8xf32, #tpu.memory_space<vmem>>, vector<1x8xf32>,
    return
  }
  func.func @transform_0(%arg0: i32) -> (i32, i32) {
    %c0_i32 = arith.constant 0 : i32
    %c0_i32_0 = arith.constant 0 : i32
    return %arg0, %c0_i32 : i32, i32
  }
  func.func @transform_1(%arg0: i32) -> (i32, i32) {
    %c0_i32 = arith.constant 0 : i32
    %c0_i32_0 = arith.constant 0 : i32
    %c0_i32_1 = arith.constant 0 : i32
    return %c0_i32, %c0_i32_0 : i32, i32
  }
  func.func @transform_2(%arg0: i32) -> (i32, i32) {
    %c0_i32 = arith.constant 0 : i32
    %c0_i32_0 = arith.constant 0 : i32
    %c0_i32_1 = arith.constant 0 : i32
    return %c0_i32, %c0_i32_0 : i32, i32
  }
  func.func @transform_3(%arg0: i32) -> (i32, i32) {
    %c0_i32 = arith.constant 0 : i32
    %c0_i32_0 = arith.constant 0 : i32
    %c0_i32_1 = arith.constant 0 : i32
    return %c0_i32, %c0_i32_0 : i32, i32
  }
  func.func @transform_4(%arg0: i32) -> (i32, i32) {
    %c0_i32 = arith.constant 0 : i32
    %c0_i32_0 = arith.constant 0 : i32
    %c0_i32_1 = arith.constant 0 : i32
    return %c0_i32, %c0_i32_0 : i32, i32
  }
  func.func @transform_5(%arg0: i32) -> (i32, i32) {
    %c0_i32 = arith.constant 0 : i32
    %c0_i32_0 = arith.constant 0 : i32
    %c0_i32_1 = arith.constant 0 : i32
    return %c0_i32, %c0_i32_0 : i32, i32
  }
  func.func @transform_6(%arg0: i32) -> (i32, i32) {
    %c0_i32 = arith.constant 0 : i32
    %c0_i32_0 = arith.constant 0 : i32
    %c0_i32_1 = arith.constant 0 : i32
    return %c0_i32, %c0_i32_0 : i32, i32
  }
  func.func @transform_7(%arg0: i32) -> (i32, i32) {
    %c0_i32 = arith.constant 0 : i32
    %c0_i32_0 = arith.constant 0 : i32
    %c0_i32_1 = arith.constant 0 : i32
    return %c0_i32, %c0_i32_0 : i32, i32
  }
  func.func @transform_8(%arg0: i32) -> (i32, i32) {
    %c0_i32 = arith.constant 0 : i32
    %c0_i32_0 = arith.constant 0 : i32
    %c0_i32_1 = arith.constant 0 : i32
    return %c0_i32, %c0_i32_0 : i32, i32
  }
  func.func @transform_9(%arg0: i32) -> (i32, i32) {
    %c0_i32 = arith.constant 0 : i32
    %c0_i32_0 = arith.constant 0 : i32
    return %c0_i32, %arg0 : i32, i32
  }
}

</mosaic_0001>

<llo_original>
// kernel: critic_forward.1
$region0: #{critic_forward.1}
  #allocation0 [shape = 'u32[]', space=smem, size = 0x4, offset = 0x4, fixed_abs, tag = 'smem constant byte address 0x4 - core index']
  #allocation1 [shape = 'u32[144,128]{1,0:T(1,128)}', space=vmem, size = 0x12000, scoped, tag = 'internal scratch']
  #allocation2 [shape = 'f32[1,1]{1,0:T(1,128)S(1)}', space=vmem, size = 0x200, scoped, tag = 'scoped memory for critic_forward.1']
  %s0 = inlined_call_operand.vmem [shape: bf16[8,12], index: 0, kind: input, shape index: {}]
  %s1 = inlined_call_operand.vmem [shape: bf16[12,256], index: 1, kind: input, shape index: {}]
  %s2 = inlined_call_operand.vmem [shape: f32[1,256], index: 2, kind: input, shape index: {}]
  %s3 = inlined_call_operand.hbm [shape: bf16[256,128], index: 3, kind: input, shape index: {}]
  %s4 = inlined_call_operand.vmem [shape: f32[1,128], index: 4, kind: input, shape index: {}]
  %s5 = inlined_call_operand.vmem [shape: bf16[128,32], index: 5, kind: input, shape index: {}]
  %s6 = inlined_call_operand.vmem [shape: f32[1,32], index: 6, kind: input, shape index: {}]
  %s7 = inlined_call_operand.vmem [shape: bf16[1,32], index: 7, kind: input, shape index: {}]
  %s8 = inlined_call_operand.<no memory space> [shape: f32[1,1], index: 8, kind: input, shape index: {}]
  %s9 = inlined_call_operand.hbm [shape: f32[1,8], index: 9, kind: output, shape index: {}]
  %s10 = sld [smem:[#allocation0]]
  $region50: #{critic_forward.1} parent=0
    _
  %s12 = ssub.s32 1, %s10
  %s13 = scalar_select 0, %s12, %s10
  %v14 = vstv %s8
  %15 = vst [vmem:[#allocation2] sm:$0x1] %v14
  $region1: #{critic_forward.1} parent=0
    #allocation3 [shape = 'u8[65536]{0}', space=vmem, size = 0x10000, scoped, tag = 'input window, operand 3, single buffered']
    #allocation4 [shape = 's32[1]{0}', space=sflag, size = 0x4, scoped, tag = 'scoped memory for critic_forward.1']
    #allocation5 [shape = 's32[1]{0}', space=sflag, size = 0x4, scoped, tag = 'scoped memory for critic_forward.1']
    #allocation6 [shape = 'u8[512]{0}', space=vmem, size = 0x400, scoped, tag = 'output window, operand 0, single buffered']
    %16 = vsyncpa [#allocation4], 0
    %17 = vsyncpa [#allocation5], 0
    // Predicated region
    $region2: #{critic_forward.1} parent=1 // pred_check
      _
    $region3: #{critic_forward.1} parent=1 // pred_check_branch
      %19 = sbr.rel (0) target = $region5
    $region4: #{critic_forward.1} parent=1 // pred_region
      _
    $region5: #{critic_forward.1} parent=1 // pred_fallthru
      _
    // Predicated region
    $region6: #{critic_forward.1} parent=1 // pred_check
      _
    $region7: #{critic_forward.1} parent=1 // pred_check_branch
      %21 = sbr.rel (0) target = $region9
    $region8: #{critic_forward.1} parent=1 // pred_region
      _
    $region9: #{critic_forward.1} parent=1 // pred_fallthru
      _
    // Predicated region
    $region10: #{critic_forward.1} parent=1 // pred_check
      _
    $region11: #{critic_forward.1} parent=1 // pred_check_branch
      %23 = sbr.rel (0) target = $region13
    $region12: #{critic_forward.1} parent=1 // pred_region
      _
    $region13: #{critic_forward.1} parent=1 // pred_fallthru
      _
    // Predicated region
    $region14: #{critic_forward.1} parent=1 // pred_check
      _
    $region15: #{critic_forward.1} parent=1 // pred_check_branch
      %25 = sbr.rel (0) target = $region17
    $region16: #{critic_forward.1} parent=1 // pred_region
      %s27 = ssub.s32 2048, 2048
      %28 = vsyncadd [#allocation4], %s27
      %s29 = sshll.u32 [#allocation3], 4
      %s30 = int_to_ptr.vmem [resolvable:$true] %s29
      %35 = dma.hbm_to_vmem [thread:$0]  %s3, 2048, %s30, [#allocation4], 64, 64, 4
    $region17: #{critic_forward.1} parent=1 // pred_fallthru
      _
    // Predicated region
    $region18: #{critic_forward.1} parent=1 // pred_check
      _
    $region19: #{critic_forward.1} parent=1 // pred_check_branch
      %37 = sbr.rel (0) target = $region21
    $region20: #{critic_forward.1} parent=1 // pred_region
      _
    $region21: #{critic_forward.1} parent=1 // pred_fallthru
      _
    // Predicated region
    $region22: #{critic_forward.1} parent=1 // pred_check
      _
    $region23: #{critic_forward.1} parent=1 // pred_check_branch
      %39 = sbr.rel (0) target = $region25
    $region24: #{critic_forward.1} parent=1 // pred_region
      _
    $region25: #{critic_forward.1} parent=1 // pred_fallthru
      _
    // Predicated region
    $region26: #{critic_forward.1} parent=1 // pred_check
      _
    $region27: #{critic_forward.1} parent=1 // pred_check_branch
      %41 = sbr.rel (0) target = $region29
    $region28: #{critic_forward.1} parent=1 // pred_region
      _
    $region29: #{critic_forward.1} parent=1 // pred_fallthru
      _
    // Predicated region
    $region30: #{critic_forward.1} parent=1 // pred_check
      _
    $region31: #{critic_forward.1} parent=1 // pred_check_branch
      %43 = sbr.rel (0) target = $region33
    $region32: #{critic_forward.1} parent=1 // pred_region
      _
    $region33: #{critic_forward.1} parent=1 // pred_fallthru
      _
    // Predicated region
    $region34: #{critic_forward.1} parent=1 // pred_check
      _
    $region35: #{critic_forward.1} parent=1 // pred_check_branch
      %45 = sbr.rel (0) target = $region37
    $region36: #{critic_forward.1} parent=1 // pred_region
      _
    $region37: #{critic_forward.1} parent=1 // pred_fallthru
      _
    // Predicated region
    $region38: #{critic_forward.1} parent=1 // pred_check
      _
    $region39: #{critic_forward.1} parent=1 // pred_check_branch
      %47 = sbr.rel (0) target = $region41
    $region40: #{critic_forward.1} parent=1 // pred_region
      %48 = dma.done [#allocation4], 2048
    $region41: #{critic_forward.1} parent=1 // pred_fallthru
      _
    %v50 = vld [vmem:[%s0] sm:$0xf]
    %v51 = vld [vmem:[%s1] sm:$0xff]
    %v52 = vld [vmem:[%s1 + $0x8] sm:$0x33]
    %v53 = vld [vmem:[%s2] sm:$0x3]
    %v55 = vlaneseq
    %v56 = vshrl.u32 %v55, 7
    %v57 = vsub.s32 0, %v56
    %v58 = vrot.slane %v53, %v57
    %v59 = vlaneseq
    %v60 = vshrl.u32 %v59, 7
    %v61 = vsub.s32 1, %v60
    %v62 = vrot.slane %v53, %v61
    %v67 = vunpack.c.l.b16 %v51
    %v68 = vunpack.c.h.b16 %v51
    %v69 = vunpack.c.l.b16 %v52
    %v70 = vunpack.c.h.b16 %v52
    %v71 = vpack.c.b16 %v69, %v67
    %v72 = vpack.c.b16 %v70, %v68
    %vm73 = vcmask 97280
    %v75 = vsel %vm73, %v50, 0
    %vm77 = vcmask 1045504
    %v79 = vsel %vm77, %v71, 0
    %v82 = vsel %vm77, %v72, 0
    %84 = vmatprep.subr.bf16.mxu0 0
    %85 = vmatpush1.bf16.msra.mxu0 0
    %86 = vmatprep.subr.bf16.mxu0 0
    %87 = vmatpush1.bf16.msra.mxu0 0
    %88 = vmatprep.subr.bf16.mxu0 0
    %89 = vmatpush1.bf16.msra.mxu0 0
    %90 = vmatprep.subr.bf16.mxu0 0
    %91 = vmatpush1.bf16.msra.mxu0 0
    %92 = vmatprep.subr.bf16.mxu0 0
    %93 = vmatpush1.bf16.msra.mxu0 0
    %94 = vmatprep.subr.bf16.mxu0 0
    %95 = vmatpush1.bf16.msra.mxu0 0
    %96 = vmatprep.subr.bf16.mxu0 0
    %97 = vmatpush1.bf16.msra.mxu0 0
    %98 = vmatprep.subr.bf16.mxu0 %v82
    %99 = vmatpush1.bf16.msra.mxu0 %v79
    %100 = vmatprep.subr.bf16.mxu0 0
    %101 = vmatpush2.bf16.msra.mxu0 0
    %102 = vmatprep.subr.bf16.mxu0 0
    %103 = vmatpush2.bf16.msra.mxu0 0
    %104 = vmatprep.subr.bf16.mxu0 0
    %105 = vmatpush2.bf16.msra.mxu0 0
    %106 = vmatprep.subr.bf16.mxu0 0
    %107 = vmatpush2.bf16.msra.mxu0 0
    %108 = vmatprep.subr.bf16.mxu0 0
    %109 = vmatpush2.bf16.msra.mxu0 0
    %110 = vmatprep.subr.bf16.mxu0 0
    %111 = vmatpush2.bf16.msra.mxu0 0
    %112 = vmatprep.subr.bf16.mxu0 0
    %113 = vmatpush2.bf16.msra.mxu0 0
    %114 = vmatprep.subr.bf16.mxu0 0
    %115 = vmatpush2.bf16.msra.mxu0 0
    %116 = vmatprep.mubr.bf16.mxu0 0
    %117 = vmatmul.mubr.bf16.gmra.mxu0 %v75
    %v118 = vpop.f32.mrf.mxu0
    %v119 = vadd.f32 %v58, %v118
    %v120 = vpop.f32.mrf.mxu0
    %v121 = vadd.f32 %v62, %v120
    %v122 = vpop.f32.mrf.mxu0
    %v123 = vpop.f32.mrf.mxu0
    %124 = vdwg.mxu0
    %v125 = vmax.f32 %v119, 0.0
    %v126 = vmax.f32 %v121, 0.0
    %v127 = vpack.c.bf16 %v125, %v125
    %v128 = vpack.c.bf16 %v126, %v126
    %v129 = vld [vmem:[#allocation3] sm:$0xf]
    %v130 = vld [vmem:[#allocation3 + $0x4] sm:$0xf]
    %v131 = vld [vmem:[#allocation3 + $0x8] sm:$0xf]
    %v132 = vld [vmem:[#allocation3 + $0xc] sm:$0xf]
    %v133 = vld [vmem:[#allocation3 + $0x10] sm:$0xf]
    %v134 = vld [vmem:[#allocation3 + $0x14] sm:$0xf]
    %v135 = vld [vmem:[#allocation3 + $0x18] sm:$0xf]
    %v136 = vld [vmem:[#allocation3 + $0x1c] sm:$0xf]
    %v137 = vld [vmem:[#allocation3 + $0x20] sm:$0xf]
    %v138 = vld [vmem:[#allocation3 + $0x24] sm:$0xf]
    %v139 = vld [vmem:[#allocation3 + $0x28] sm:$0xf]
    %v140 = vld [vmem:[#allocation3 + $0x2c] sm:$0xf]
    %v141 = vld [vmem:[#allocation3 + $0x30] sm:$0xf]
    %v142 = vld [vmem:[#allocation3 + $0x34] sm:$0xf]
    %v143 = vld [vmem:[#allocation3 + $0x38] sm:$0xf]
    %v144 = vld [vmem:[#allocation3 + $0x3c] sm:$0xf]
    %v145 = vld [vmem:[#allocation3 + $0x40] sm:$0xf]
    %v146 = vld [vmem:[#allocation3 + $0x44] sm:$0xf]
    %v147 = vld [vmem:[#allocation3 + $0x48] sm:$0xf]
    %v148 = vld [vmem:[#allocation3 + $0x4c] sm:$0xf]
    %v149 = vld [vmem:[#allocation3 + $0x50] sm:$0xf]
    %v150 = vld [vmem:[#allocation3 + $0x54] sm:$0xf]
    %v151 = vld [vmem:[#allocation3 + $0x58] sm:$0xf]
    %v152 = vld [vmem:[#allocation3 + $0x5c] sm:$0xf]
    %v153 = vld [vmem:[#allocation3 + $0x60] sm:$0xf]
    %v154 = vld [vmem:[#allocation3 + $0x64] sm:$0xf]
    %v155 = vld [vmem:[#allocation3 + $0x68] sm:$0xf]
    %v156 = vld [vmem:[#allocation3 + $0x6c] sm:$0xf]
    %v157 = vld [vmem:[#allocation3 + $0x70] sm:$0xf]
    %v158 = vld [vmem:[#allocation3 + $0x74] sm:$0xf]
    %v159 = vld [vmem:[#allocation3 + $0x78] sm:$0xf]
    %v160 = vld [vmem:[#allocation3 + $0x7c] sm:$0xf]
    %v161 = vld [vmem:[%s4] sm:$0x1]
    %v163 = vlaneseq
    %v164 = vshrl.u32 %v163, 7
    %v165 = vsub.s32 0, %v164
    %v166 = vrot.slane %v161, %v165
    %v200 = vunpack.c.l.b16 %v129
    %v201 = vunpack.c.l.b16 %v130
    %v202 = vunpack.c.l.b16 %v131
    %v203 = vunpack.c.l.b16 %v132
    %v204 = vunpack.c.l.b16 %v133
    %v205 = vunpack.c.l.b16 %v134
    %v206 = vunpack.c.l.b16 %v135
    %v207 = vunpack.c.l.b16 %v136
    %v208 = vunpack.c.l.b16 %v137
    %v209 = vunpack.c.l.b16 %v138
    %v210 = vunpack.c.l.b16 %v139
    %v211 = vunpack.c.l.b16 %v140
    %v212 = vunpack.c.l.b16 %v141
    %v213 = vunpack.c.l.b16 %v142
    %v214 = vunpack.c.l.b16 %v143
    %v215 = vunpack.c.l.b16 %v144
    %v216 = vunpack.c.l.b16 %v145
    %v217 = vunpack.c.l.b16 %v146
    %v218 = vunpack.c.l.b16 %v147
    %v219 = vunpack.c.l.b16 %v148
    %v220 = vunpack.c.l.b16 %v149
    %v221 = vunpack.c.l.b16 %v150
    %v222 = vunpack.c.l.b16 %v151
    %v223 = vunpack.c.l.b16 %v152
    %v224 = vunpack.c.l.b16 %v153
    %v225 = vunpack.c.l.b16 %v154
    %v226 = vunpack.c.l.b16 %v155
    %v227 = vunpack.c.l.b16 %v156
    %v228 = vunpack.c.l.b16 %v157
    %v229 = vunpack.c.l.b16 %v158
    %v230 = vunpack.c.l.b16 %v159
    %v231 = vunpack.c.l.b16 %v160
    %v232 = vpack.c.b16 %v201, %v200
    %v233 = vpack.c.b16 %v203, %v202
    %v234 = vpack.c.b16 %v205, %v204
    %v235 = vpack.c.b16 %v207, %v206
    %v236 = vpack.c.b16 %v209, %v208
    %v237 = vpack.c.b16 %v211, %v210
    %v238 = vpack.c.b16 %v213, %v212
    %v239 = vpack.c.b16 %v215, %v214
    %v240 = vpack.c.b16 %v217, %v216
    %v241 = vpack.c.b16 %v219, %v218
    %v242 = vpack.c.b16 %v221, %v220
    %v243 = vpack.c.b16 %v223, %v222
    %v244 = vpack.c.b16 %v225, %v224
    %v245 = vpack.c.b16 %v227, %v226
    %v246 = vpack.c.b16 %v229, %v228
    %v247 = vpack.c.b16 %v231, %v230
    %264 = vmatprep.subr.bf16.mxu0 0
    %265 = vmatpush1.bf16.msra.mxu0 %v239
    %266 = vmatprep.subr.bf16.mxu0 0
    %267 = vmatpush1.bf16.msra.mxu0 %v238
    %268 = vmatprep.subr.bf16.mxu0 0
    %269 = vmatpush1.bf16.msra.mxu0 %v237
    %270 = vmatprep.subr.bf16.mxu0 0
    %271 = vmatpush1.bf16.msra.mxu0 %v236
    %272 = vmatprep.subr.bf16.mxu0 0
    %273 = vmatpush1.bf16.msra.mxu0 %v235
    %274 = vmatprep.subr.bf16.mxu0 0
    %275 = vmatpush1.bf16.msra.mxu0 %v234
    %276 = vmatprep.subr.bf16.mxu0 0
    %277 = vmatpush1.bf16.msra.mxu0 %v233
    %278 = vmatprep.subr.bf16.mxu0 0
    %279 = vmatpush1.bf16.msra.mxu0 %v232
    %280 = vmatprep.subr.bf16.mxu0 0
    %281 = vmatpush2.bf16.msra.mxu0 %v247
    %282 = vmatprep.subr.bf16.mxu0 0
    %283 = vmatpush2.bf16.msra.mxu0 %v246
    %284 = vmatprep.subr.bf16.mxu0 0
    %285 = vmatpush2.bf16.msra.mxu0 %v245
    %286 = vmatprep.subr.bf16.mxu0 0
    %287 = vmatpush2.bf16.msra.mxu0 %v244
    %288 = vmatprep.subr.bf16.mxu0 0
    %289 = vmatpush2.bf16.msra.mxu0 %v243
    %290 = vmatprep.subr.bf16.mxu0 0
    %291 = vmatpush2.bf16.msra.mxu0 %v242
    %292 = vmatprep.subr.bf16.mxu0 0
    %293 = vmatpush2.bf16.msra.mxu0 %v241
    %294 = vmatprep.subr.bf16.mxu0 0
    %295 = vmatpush2.bf16.msra.mxu0 %v240
    %296 = vmatprep.mubr.bf16.mxu0 %v128
    %297 = vmatmul.mubr.bf16.gmra.mxu0 %v127
    %v298 = vpop.f32.mrf.mxu0
    %v299 = vadd.f32 %v166, %v298
    %v300 = vpop.f32.mrf.mxu0
    %v301 = vpop.f32.mrf.mxu0
    %v302 = vpop.f32.mrf.mxu0
    %303 = vdwg.mxu0
    %v304 = vmax.f32 %v299, 0.0
    %v305 = vpack.c.bf16 %v304, %v304
    %v306 = vld [vmem:[%s5] sm:$0xf]
    %v307 = vld [vmem:[%s5 + $0x4] sm:$0xf]
    %v308 = vld [vmem:[%s5 + $0x8] sm:$0xf]
    %v309 = vld [vmem:[%s5 + $0xc] sm:$0xf]
    %v310 = vld [vmem:[%s5 + $0x10] sm:$0xf]
    %v311 = vld [vmem:[%s5 + $0x14] sm:$0xf]
    %v312 = vld [vmem:[%s5 + $0x18] sm:$0xf]
    %v313 = vld [vmem:[%s5 + $0x1c] sm:$0xf]
    %v314 = vld [vmem:[%s5 + $0x20] sm:$0xf]
    %v315 = vld [vmem:[%s5 + $0x24] sm:$0xf]
    %v316 = vld [vmem:[%s5 + $0x28] sm:$0xf]
    %v317 = vld [vmem:[%s5 + $0x2c] sm:$0xf]
    %v318 = vld [vmem:[%s5 + $0x30] sm:$0xf]
    %v319 = vld [vmem:[%s5 + $0x34] sm:$0xf]
    %v320 = vld [vmem:[%s5 + $0x38] sm:$0xf]
    %v321 = vld [vmem:[%s5 + $0x3c] sm:$0xf]
    %v322 = vld [vmem:[%s6] sm:$0x1]
    %v324 = vlaneseq
    %v325 = vshrl.u32 %v324, 7
    %v326 = vsub.s32 0, %v325
    %v327 = vrot.slane %v322, %v326
    %v345 = vunpack.c.l.b16 %v306
    %v346 = vunpack.c.l.b16 %v307
    %v347 = vunpack.c.l.b16 %v308
    %v348 = vunpack.c.l.b16 %v309
    %v349 = vunpack.c.l.b16 %v310
    %v350 = vunpack.c.l.b16 %v311
    %v351 = vunpack.c.l.b16 %v312
    %v352 = vunpack.c.l.b16 %v313
    %v353 = vunpack.c.l.b16 %v314
    %v354 = vunpack.c.l.b16 %v315
    %v355 = vunpack.c.l.b16 %v316
    %v356 = vunpack.c.l.b16 %v317
    %v357 = vunpack.c.l.b16 %v318
    %v358 = vunpack.c.l.b16 %v319
    %v359 = vunpack.c.l.b16 %v320
    %v360 = vunpack.c.l.b16 %v321
    %v361 = vpack.c.b16 %v346, %v345
    %v362 = vpack.c.b16 %v348, %v347
    %v363 = vpack.c.b16 %v350, %v349
    %v364 = vpack.c.b16 %v352, %v351
    %v365 = vpack.c.b16 %v354, %v353
    %v366 = vpack.c.b16 %v356, %v355
    %v367 = vpack.c.b16 %v358, %v357
    %v368 = vpack.c.b16 %v360, %v359
    %377 = vmatprep.subr.bf16.mxu0 0
    %378 = vmatpush1.bf16.msra.mxu0 %v368
    %379 = vmatprep.subr.bf16.mxu0 0
    %380 = vmatpush1.bf16.msra.mxu0 %v367
    %381 = vmatprep.subr.bf16.mxu0 0
    %382 = vmatpush1.bf16.msra.mxu0 %v366
    %383 = vmatprep.subr.bf16.mxu0 0
    %384 = vmatpush1.bf16.msra.mxu0 %v365
    %385 = vmatprep.subr.bf16.mxu0 0
    %386 = vmatpush1.bf16.msra.mxu0 %v364
    %387 = vmatprep.subr.bf16.mxu0 0
    %388 = vmatpush1.bf16.msra.mxu0 %v363
    %389 = vmatprep.subr.bf16.mxu0 0
    %390 = vmatpush1.bf16.msra.mxu0 %v362
    %391 = vmatprep.subr.bf16.mxu0 0
    %392 = vmatpush1.bf16.msra.mxu0 %v361
    %393 = vmatprep.subr.bf16.mxu0 0
    %394 = vmatpush2.bf16.msra.mxu0 0
    %395 = vmatprep.subr.bf16.mxu0 0
    %396 = vmatpush2.bf16.msra.mxu0 0
    %397 = vmatprep.subr.bf16.mxu0 0
    %398 = vmatpush2.bf16.msra.mxu0 0
    %399 = vmatprep.subr.bf16.mxu0 0
    %400 = vmatpush2.bf16.msra.mxu0 0
    %401 = vmatprep.subr.bf16.mxu0 0
    %402 = vmatpush2.bf16.msra.mxu0 0
    %403 = vmatprep.subr.bf16.mxu0 0
    %404 = vmatpush2.bf16.msra.mxu0 0
    %405 = vmatprep.subr.bf16.mxu0 0
    %406 = vmatpush2.bf16.msra.mxu0 0
    %407 = vmatprep.subr.bf16.mxu0 0
    %408 = vmatpush2.bf16.msra.mxu0 0
    %409 = vmatprep.mubr.bf16.mxu0 0
    %410 = vmatmul.mubr.bf16.gmra.mxu0 %v305
    %v411 = vpop.f32.mrf.mxu0
    %v412 = vadd.f32 %v327, %v411
    %v413 = vpop.f32.mrf.mxu0
    %v414 = vpop.f32.mrf.mxu0
    %v415 = vpop.f32.mrf.mxu0
    %416 = vdwg.mxu0
    %v417 = vmax.f32 %v412, 0.0
    %v418 = vpack.c.bf16 %v417, %v417
    %v419 = vld [vmem:[%s7] sm:$0x1]
    %v420 = vld [vmem:[#allocation2] sm:$0x1]
    %422 = vset.pattern.permute.xlu0 0
    %423 = vperm.xlu0 %422, %v420
    %v424 = vpop.permute.xlu0 %423
    %v426 = vlaneseq
    %v427 = vshrl.u32 %v426, 7
    %v428 = vsub.s32 0, %v427
    %v429 = vrot.slane %v424, %v428
    %vm430 = vcmask 261120
    %v432 = vsel %vm430, %v419, 0
    %v435 = vsel %vm430, %v418, 0
    %437 = vmatprep.subr.bf16.mxu0 0
    %438 = vmatpush1.bf16.xpose.msra.mxu0 0
    %439 = vmatprep.subr.bf16.mxu0 0
    %440 = vmatpush1.bf16.xpose.msra.mxu0 0
    %441 = vmatprep.subr.bf16.mxu0 0
    %442 = vmatpush1.bf16.xpose.msra.mxu0 0
    %443 = vmatprep.subr.bf16.mxu0 0
    %444 = vmatpush1.bf16.xpose.msra.mxu0 0
    %445 = vmatprep.subr.bf16.mxu0 0
    %446 = vmatpush1.bf16.xpose.msra.mxu0 0
    %447 = vmatprep.subr.bf16.mxu0 0
    %448 = vmatpush1.bf16.xpose.msra.mxu0 0
    %449 = vmatprep.subr.bf16.mxu0 0
    %450 = vmatpush1.bf16.xpose.msra.mxu0 0
    %451 = vmatprep.subr.bf16.mxu0 0
    %452 = vmatpush1.bf16.xpose.msra.mxu0 %v435
    %453 = vmatprep.subr.bf16.mxu0 0
    %454 = vmatpush2.bf16.xpose.msra.mxu0 0
    %455 = vmatprep.subr.bf16.mxu0 0
    %456 = vmatpush2.bf16.xpose.msra.mxu0 0
    %457 = vmatprep.subr.bf16.mxu0 0
    %458 = vmatpush2.bf16.xpose.msra.mxu0 0
    %459 = vmatprep.subr.bf16.mxu0 0
    %460 = vmatpush2.bf16.xpose.msra.mxu0 0
    %461 = vmatprep.subr.bf16.mxu0 0
    %462 = vmatpush2.bf16.xpose.msra.mxu0 0
    %463 = vmatprep.subr.bf16.mxu0 0
    %464 = vmatpush2.bf16.xpose.msra.mxu0 0
    %465 = vmatprep.subr.bf16.mxu0 0
    %466 = vmatpush2.bf16.xpose.msra.mxu0 0
    %467 = vmatprep.subr.bf16.mxu0 0
    %468 = vmatpush2.bf16.xpose.msra.mxu0 0
    %469 = vmatprep.mubr.bf16.mxu0 0
    %470 = vmatmul.mubr.bf16.gmra.mxu0 %v432
    %v471 = vpop.f32.mrf.mxu0
    %v472 = vadd.f32 %v429, %v471
    %v473 = vpop.f32.mrf.mxu0
    %v474 = vpop.f32.mrf.mxu0
    %v475 = vpop.f32.mrf.mxu0
    %476 = vdwg.mxu0
    %vm477 = vcmask 57344
    %478 = vst.msk [vmem:[#allocation6] sm:$0x1] %vm477, %v472
    // Predicated region
    $region42: #{critic_forward.1} parent=1 // pred_check
      _
    $region43: #{critic_forward.1} parent=1 // pred_check_branch
      %480 = sbr.rel (0) target = $region45
    $region44: #{critic_forward.1} parent=1 // pred_region
      %s482 = ssub.s32 16, 16
      %483 = vsyncadd [#allocation5], %s482
      %s485 = sshll.u32 [#allocation6], 4
      %s486 = int_to_ptr.vmem [resolvable:$true] %s485
      %488 = dma.vmem_to_hbm [thread:$0]  %s486, 16, %s9, [#allocation5]
    $region45: #{critic_forward.1} parent=1 // pred_fallthru
      _
    // Predicated region
    $region46: #{critic_forward.1} parent=1 // pred_check
      _
    $region47: #{critic_forward.1} parent=1 // pred_check_branch
      %490 = sbr.rel (0) target = $region49
    $region48: #{critic_forward.1} parent=1 // pred_region
      %491 = dma.done [#allocation5], 16
    $region49: #{critic_forward.1} parent=1 // pred_fallthru
      _
    %492 = vsyncpa [#allocation4], 1
    %493 = vsyncpa [#allocation5], 1

</llo_original>
